<compile_context>
chip_gen: v6e
topology: v6e:2x2x1
jax: 0.10.0
libtpu: 0.0.40
codegen_flags: <defaults>
</compile_context>

<pallas_src>
import functools

import jax
import jax.numpy as jnp
from jax.experimental import pallas as pl
from jax.experimental.pallas import tpu as pltpu

_LANE = 128   # last block dim: multiple of 128 (or equal to full array dim)
_SUBLANE = 8  # second-to-last block dim: multiple of 8 (or full array dim)


def erfact_kernel(x_ref, a_ref, b_ref, o_ref):
    # Purely elementwise: exp goes to the EUP, the erf polynomial to the VPU.
    # Compute in f32 regardless of I/O dtype (bf16 I/O keeps f32 math).
    # exp(b*x) -> +inf for b*x > ~88.7 in f32; erf(inf) == 1 so y == x, which
    # matches PyTorch float32 behavior.
    x = x_ref[...].astype(jnp.float32)          # (tb, th)
    a = a_ref[...].astype(jnp.float32)          # (1, th) -> broadcasts over rows
    b = b_ref[...].astype(jnp.float32)          # (1, th)
    y = x * jax.lax.erf(a * jnp.exp(b * x))
    o_ref[...] = y.astype(o_ref.dtype)


def _round_up(n, m):
    return ((n + m - 1) // m) * m


def _sublane_multiple(itemsize):
    # f32 -> 8, bf16 -> 16, int8/fp8 -> 32 (packed sublanes).
    return _SUBLANE * max(1, 4 // max(1, itemsize))


def _footprint_bytes(tb, th, itemsize):
    # x + out blocks, double-buffered, plus a/b slabs (f32, padded to 8
    # sublanes in VMEM, double-buffered).
    return 4 * tb * th * itemsize + 4 * _SUBLANE * th * 4


def _pick_tiles(B, H, itemsize, budget_bytes, tile_b, tile_h):
    sub = _sublane_multiple(itemsize)
    if tile_b is not None or tile_h is not None:       # explicit overrides
        tb = tile_b if tile_b is not None else 512
        th = tile_h if tile_h is not None else H
        return tb, th
    # Preferred: full-H row slabs -> 1-D batch grid, resident a/b,
    # fully contiguous row DMAs.
    for tb in (1024, 512, 256):
        tb_c = max(sub, min(tb, _round_up(B, sub)))
        if _footprint_bytes(tb_c, H, itemsize) <= budget_bytes:
            return tb_c, H
    # Fallback for very large H: 2-D grid with lane-dense H tiles.
    tb = max(sub, min(512, _round_up(B, sub)))
    th = max(_LANE, min(2048, _round_up(H, _LANE)))
    while th > _LANE and _footprint_bytes(tb, th, itemsize) > budget_bytes:
        th = max(_LANE, ((th // 2) // _LANE) * _LANE)
    while tb > sub and _footprint_bytes(tb, th, itemsize) > budget_bytes:
        tb = max(sub, ((tb // 2) // sub) * sub)
    return tb, th


@functools.partial(jax.jit, static_argnames=("tile_b", "tile_h"))
def erfact(x, a, b, *, tile_b=None, tile_h=None):
    """y = x * erf(a * exp(b * x)); x: (B, H), a/b: (1, H)."""
    B, H = x.shape
    itemsize = jnp.dtype(x.dtype).itemsize

    # Generation-aware VMEM budget: half of physical capacity (v5e/v6e 128 MiB,
    # v7x 64 MiB), leaving headroom for compiler internal scratch.
    try:
        vmem_cap = int(pltpu.get_tpu_info().vmem_capacity_bytes)
    except Exception:
        vmem_cap = 64 << 20   # conservative fallback: v7x per-TC capacity
    budget = vmem_cap // 2

    tb, th = _pick_tiles(B, H, itemsize, budget, tile_b, tile_h)

    vmem_need = _footprint_bytes(tb, th, itemsize) + (4 << 20)
    vmem_limit = int(min(max(vmem_need, 16 << 20), budget))

    if th >= H:
        # 1-D grid over batch; a/b slabs are DMA'd once and stay resident.
        # Boundary batch block (B % tb != 0) is masked by Pallas; OOB loads
        # only feed masked lanes — safe because the op is purely elementwise.
        th = H
        grid = (pl.cdiv(B, tb),)
        in_specs = [
            pl.BlockSpec((tb, H), lambda i: (i, 0)),   # x row slab
            pl.BlockSpec((1, H), lambda i: (0, 0)),    # a (resident)
            pl.BlockSpec((1, H), lambda i: (0, 0)),    # b (resident)
        ]
        out_specs = pl.BlockSpec((tb, H), lambda i: (i, 0))
        dim_sem = ("parallel",)
    else:
        # 2-D grid with the batch axis innermost so the a/b block index is
        # unchanged across consecutive steps (their re-DMA is skipped).
        grid = (pl.cdiv(H, th), pl.cdiv(B, tb))
        in_specs = [
            pl.BlockSpec((tb, th), lambda j, i: (i, j)),
            pl.BlockSpec((1, th), lambda j, i: (0, j)),
            pl.BlockSpec((1, th), lambda j, i: (0, j)),
        ]
        out_specs = pl.BlockSpec((tb, th), lambda j, i: (i, j))
        dim_sem = ("parallel", "parallel")

    return pl.pallas_call(
        erfact_kernel,
        out_shape=jax.ShapeDtypeStruct((B, H), x.dtype),
        grid_spec=pl.GridSpec(
            grid=grid,
            in_specs=in_specs,
            out_specs=out_specs,
        ),
        compiler_params=pltpu.CompilerParams(
            dimension_semantics=dim_sem,
            vmem_limit_bytes=vmem_limit,
        ),
    )(x, a, b)


if __name__ == "__main__":
    key = jax.random.PRNGKey(0)
    batch, n_hidden = 16, 32

    # Matches nn.Parameter(torch.full((1, n_hidden), 0.75)).
    a = jnp.full((1, n_hidden), 0.75, dtype=jnp.float32)
    b = jnp.full((1, n_hidden), 0.75, dtype=jnp.float32)
    x = jax.random.normal(key, (batch, n_hidden), dtype=jnp.float32)

    y = jax.block_until_ready(erfact(x, a, b))
    y_ref = x * jax.lax.erf(a * jnp.exp(b * x))
    assert y.shape == (batch, n_hidden)
    assert jnp.allclose(y, y_ref, atol=1e-5, rtol=1e-5)

    # Non-divisible larger shape: exercises the masked boundary-block path
    # (no wrapper-side pad/slice round-trips).
    x2 = jax.random.normal(jax.random.PRNGKey(1), (517, 1000), dtype=jnp.float32)
    a2 = jnp.full((1, 1000), 0.75, dtype=jnp.float32)
    b2 = jnp.full((1, 1000), 0.75, dtype=jnp.float32)
    y2 = jax.block_until_ready(erfact(x2, a2, b2))
    y2_ref = x2 * jax.lax.erf(a2 * jnp.exp(b2 * x2))
    assert y2.shape == x2.shape
    assert jnp.allclose(y2, y2_ref, atol=1e-5, rtol=1e-5)

    # Force the 2-D-grid fallback (tile_h < H) and check it too.
    y3 = jax.block_until_ready(erfact(x2, a2, b2, tile_b=256, tile_h=512))
    assert jnp.allclose(y3, y2_ref, atol=1e-5, rtol=1e-5)

    # bf16 I/O path (kernel still computes in f32 internally).
    xb = x2.astype(jnp.bfloat16)
    yb = jax.block_until_ready(erfact(xb, a2, b2))
    xb_f32 = xb.astype(jnp.float32)
    yb_ref = (xb_f32 * jax.lax.erf(a2 * jnp.exp(b2 * xb_f32))).astype(jnp.bfloat16)
    assert jnp.allclose(yb.astype(jnp.float32), yb_ref.astype(jnp.float32),
                        atol=3e-2, rtol=3e-2)

    print("KERNEL_OK")
</pallas_src>

<mosaic_0001>
module attributes {stable_mosaic.version = 11 : i64} {
  func.func @erfact_kernel(%arg0: i32, %arg1: memref<16x32xf32, #tpu.memory_space<vmem>>, %arg2: memref<1x32xf32, #tpu.memory_space<vmem>>, %arg3: memref<1x32xf32, #tpu.memory_space<vmem>>, %arg4: memref<16x32xf32, #tpu.memory_space<vmem>>) attributes {dimension_semantics = [#tpu.dimension_semantics<parallel>], iteration_bounds = array<i64: 1>, scalar_prefetch = 0 : i64, scratch_operands = 0 : i64, tpu.core_type = #tpu.core_type<tc>, window_params = [{transform_indices = @transform_0, window_bounds = array<i64: 16, 32>}, {pipeline_mode = #tpu.pipeline_mode<synchronous>, transform_indices = @transform_1, window_bounds = array<i64: 1, 32>}, {pipeline_mode = #tpu.pipeline_mode<synchronous>, transform_indices = @transform_2, window_bounds = array<i64: 1, 32>}, {transform_indices = @transform_3, window_bounds = array<i64: 16, 32>}]} {
    %c0 = arith.constant 0 : index
    %c0_0 = arith.constant 0 : index
    %0 = vector.load %arg1[%c0, %c0_0] : memref<16x32xf32, #tpu.memory_space<vmem>>, vector<16x32xf32>
    %c0_1 = arith.constant 0 : index
    %c0_2 = arith.constant 0 : index
    %1 = vector.load %arg2[%c0_1, %c0_2] : memref<1x32xf32, #tpu.memory_space<vmem>>, vector<1x32xf32>
    %c0_3 = arith.constant 0 : index
    %c0_4 = arith.constant 0 : index
    %2 = vector.load %arg3[%c0_3, %c0_4] : memref<1x32xf32, #tpu.memory_space<vmem>>, vector<1x32xf32>
    %3 = vector.broadcast %2 : vector<1x32xf32> to vector<16x32xf32>
    %4 = arith.mulf %3, %0 : vector<16x32xf32>
    %5 = math.exp %4 : vector<16x32xf32>
    %6 = vector.broadcast %1 : vector<1x32xf32> to vector<16x32xf32>
    %7 = arith.mulf %6, %5 : vector<16x32xf32>
    %8 = math.erf %7 : vector<16x32xf32>
    %9 = arith.mulf %0, %8 : vector<16x32xf32>
    %c0_5 = arith.constant 0 : index
    %c0_6 = arith.constant 0 : index
    %10 = vector.load %arg4[%c0_5, %c0_6] : memref<16x32xf32, #tpu.memory_space<vmem>>, vector<16x32xf32>
    tpu.vector_store %arg4[%c0_5, %c0_6], %9 {strides = array<i32>} : memref<16x32xf32, #tpu.memory_space<vmem>>, vector<16x32xf32>,
    return
  }
  func.func @transform_0(%arg0: i32) -> (i32, i32) {
    %c0_i32 = arith.constant 0 : i32
    %c0_i32_0 = arith.constant 0 : i32
    return %arg0, %c0_i32 : i32, i32
  }
  func.func @transform_1(%arg0: i32) -> (i32, i32) {
    %c0_i32 = arith.constant 0 : i32
    %c0_i32_0 = arith.constant 0 : i32
    %c0_i32_1 = arith.constant 0 : i32
    return %c0_i32, %c0_i32_0 : i32, i32
  }
  func.func @transform_2(%arg0: i32) -> (i32, i32) {
    %c0_i32 = arith.constant 0 : i32
    %c0_i32_0 = arith.constant 0 : i32
    %c0_i32_1 = arith.constant 0 : i32
    return %c0_i32, %c0_i32_0 : i32, i32
  }
  func.func @transform_3(%arg0: i32) -> (i32, i32) {
    %c0_i32 = arith.constant 0 : i32
    %c0_i32_0 = arith.constant 0 : i32
    return %arg0, %c0_i32 : i32, i32
  }
}

</mosaic_0001>

<llo_original>
// kernel: erfact.1
$region0: #{erfact.1}
  #allocation0 [shape = 'u32[]', space=smem, size = 0x4, offset = 0x4, fixed_abs, tag = 'smem constant byte address 0x4 - core index']
  #allocation1 [shape = 'u32[144,128]{1,0:T(1,128)}', space=vmem, size = 0x12000, scoped, tag = 'internal scratch']
  %s0 = inlined_call_operand.hbm [shape: f32[16,32], index: 0, kind: input, shape index: {}]
  %s1 = inlined_call_operand.vmem [shape: f32[1,32], index: 1, kind: input, shape index: {}]
  %s2 = inlined_call_operand.vmem [shape: f32[1,32], index: 2, kind: input, shape index: {}]
  %s3 = inlined_call_operand.hbm [shape: f32[16,32], index: 3, kind: output, shape index: {}]
  %s4 = sld [smem:[#allocation0]]
  $region26: #{erfact.1} parent=0
    _
  %s6 = ssub.s32 1, %s4
  %s7 = scalar_select 0, %s6, %s4
  $region1: #{erfact.1} parent=0
    #allocation2 [shape = 'u8[8192]{0}', space=vmem, size = 0x2000, scoped, tag = 'input window, operand 0, single buffered']
    #allocation3 [shape = 's32[1]{0}', space=sflag, size = 0x4, scoped, tag = 'scoped memory for erfact.1']
    #allocation4 [shape = 's32[1]{0}', space=sflag, size = 0x4, scoped, tag = 'scoped memory for erfact.1']
    #allocation5 [shape = 'u8[8192]{0}', space=vmem, size = 0x2000, scoped, tag = 'output window, operand 0, single buffered']
    %8 = vsyncpa [#allocation3], 0
    %9 = vsyncpa [#allocation4], 0
    // Predicated region
    $region2: #{erfact.1} parent=1 // pred_check
      _
    $region3: #{erfact.1} parent=1 // pred_check_branch
      %11 = sbr.rel (0) target = $region5
    $region4: #{erfact.1} parent=1 // pred_region
      %s13 = ssub.s32 256, 256
      %14 = vsyncadd [#allocation3], %s13
      %s15 = sshll.u32 [#allocation2], 4
      %s16 = int_to_ptr.vmem [resolvable:$true] %s15
      %21 = dma.hbm_to_vmem [thread:$0]  %s0, 256, %s16, [#allocation3], 128, 128, 8
    $region5: #{erfact.1} parent=1 // pred_fallthru
      _
    // Predicated region
    $region6: #{erfact.1} parent=1 // pred_check
      _
    $region7: #{erfact.1} parent=1 // pred_check_branch
      %23 = sbr.rel (0) target = $region9
    $region8: #{erfact.1} parent=1 // pred_region
      _
    $region9: #{erfact.1} parent=1 // pred_fallthru
      _
    // Predicated region
    $region10: #{erfact.1} parent=1 // pred_check
      _
    $region11: #{erfact.1} parent=1 // pred_check_branch
      %25 = sbr.rel (0) target = $region13
    $region12: #{erfact.1} parent=1 // pred_region
      _
    $region13: #{erfact.1} parent=1 // pred_fallthru
      _
    // Predicated region
    $region14: #{erfact.1} parent=1 // pred_check
      _
    $region15: #{erfact.1} parent=1 // pred_check_branch
      %27 = sbr.rel (0) target = $region17
    $region16: #{erfact.1} parent=1 // pred_region
      %28 = dma.done [#allocation3], 256
    $region17: #{erfact.1} parent=1 // pred_fallthru
      _
    %v29 = vld [vmem:[#allocation2] sm:$0xff]
    %v30 = vld [vmem:[#allocation2 + $0x8] sm:$0xff]
    %v31 = vld [vmem:[%s1] sm:$0x1]
    %v32 = vld [vmem:[%s2] sm:$0x1]
    %v34 = vlaneseq
    %v35 = vshrl.u32 %v34, 7
    %v36 = vsub.s32 0, %v35
    %v37 = vrot.slane %v32, %v36
    %v39 = vmul.f32 %v37, %v29
    %v40 = vmul.f32 %v37, %v30
    %v41 = vmul.f32 %v39, 1.442695
    %v42 = vpow.pop %v41
    %v43 = vmul.f32 %v40, 1.442695
    %v44 = vpow.pop %v43
    %v46 = vlaneseq
    %v47 = vshrl.u32 %v46, 7
    %v48 = vsub.s32 0, %v47
    %v49 = vrot.slane %v31, %v48
    %v51 = vmul.f32 %v49, %v42
    %v52 = vmul.f32 %v49, %v44
    %v53 = verf.f32.pop %v51
    %v54 = verf.f32.pop %v52
    %v55 = vmul.f32 %v29, %v53
    %v56 = vmul.f32 %v30, %v54
    %vm57 = vcmask 261120
    %58 = vst.msk [vmem:[#allocation5] sm:$0xff] %vm57, %v55
    %59 = vst.msk [vmem:[#allocation5 + $0x8] sm:$0xff] %vm57, %v56
    // Predicated region
    $region18: #{erfact.1} parent=1 // pred_check
      _
    $region19: #{erfact.1} parent=1 // pred_check_branch
      %61 = sbr.rel (0) target = $region21
    $region20: #{erfact.1} parent=1 // pred_region
      %s63 = ssub.s32 256, 256
      %64 = vsyncadd [#allocation4], %s63
      %s65 = sshll.u32 [#allocation5], 4
      %s66 = int_to_ptr.vmem [resolvable:$true] %s65
      %71 = dma.vmem_to_hbm [thread:$0]  %s66, 256, %s3, [#allocation4], 128, 128, 8
    $region21: #{erfact.1} parent=1 // pred_fallthru
      _
    // Predicated region
    $region22: #{erfact.1} parent=1 // pred_check
      _
    $region23: #{erfact.1} parent=1 // pred_check_branch
      %73 = sbr.rel (0) target = $region25
    $region24: #{erfact.1} parent=1 // pred_region
      %74 = dma.done [#allocation4], 256
    $region25: #{erfact.1} parent=1 // pred_fallthru
      _
    %75 = vsyncpa [#allocation3], 1
    %76 = vsyncpa [#allocation4], 1

</llo_original>
